<compile_context>
chip_gen: v6e
topology: v6e:2x2x1
jax: 0.10.0
libtpu: 0.0.40
codegen_flags: <defaults>
</compile_context>

<pallas_src>
import functools

import numpy as np

import jax
import jax.numpy as jnp
from jax.experimental import pallas as pl
from jax.experimental.pallas import tpu as pltpu


# Safe on v7x (64 MiB VMEM / TensorCore); can be raised to ~96 MiB on v5e/v6e.
_VMEM_LIMIT = 48 * 1024 * 1024


def _ceil_to(x, m):
    return ((x + m - 1) // m) * m


def _row_tile(H, W, target=256):
    """Rows per grid step so the MXU M-dim (TH*W) is ~target."""
    return max(1, min(H, -(-target // W)))


# ------------------------ tiled matmul + BN/bias + ReLU ------------------------

def _matmul_bn_act_kernel(x_ref, w_ref, scale_ref, shift_ref, o_ref, *, relu):
    x = x_ref[...].astype(jnp.bfloat16)
    y = jnp.dot(x, w_ref[...], preferred_element_type=jnp.float32)
    y = y * scale_ref[...] + shift_ref[...]
    if relu:
        y = jnp.maximum(y, 0.0)
    o_ref[...] = y.astype(o_ref.dtype)


def matmul_bn_act(x2d, w, scale, shift, relu, out_dtype=jnp.bfloat16, tm=1024):
    """(M,K)@(K,Cout) 1x1-conv, folded BN (or bias) + optional ReLU.

    M is tiled with a VMEM-aware tile size; weights / scale / shift stay
    resident; Cout is padded to a multiple of 128 so output stores are
    lane-dense.
    """
    M, K = x2d.shape
    Cout = w.shape[1]
    Coutp = _ceil_to(Cout, 128)

    wb = w.astype(jnp.bfloat16)
    scale = scale.astype(jnp.float32).reshape(1, -1)
    shift = shift.astype(jnp.float32).reshape(1, -1)
    if Coutp != Cout:
        wb = jnp.pad(wb, ((0, 0), (0, Coutp - Cout)))
        scale = jnp.pad(scale, ((0, 0), (0, Coutp - Cout)))
        shift = jnp.pad(shift, ((0, 0), (0, Coutp - Cout)))

    # Pick the largest M tile that fits a conservative VMEM budget
    # (x / out double-buffered, weight resident).
    budget = 40 * 1024 * 1024
    per_row = 2 * K * x2d.dtype.itemsize + 2 * Coutp * jnp.dtype(out_dtype).itemsize
    tm_fit = max(8, int((budget - K * Coutp * 2) // per_row))
    tm = int(max(8, min(tm, tm_fit, _ceil_to(M, 8))))
    tm = (tm // 8) * 8
    Mp = _ceil_to(M, tm)
    xp = jnp.pad(x2d, ((0, Mp - M), (0, 0))) if Mp != M else x2d

    out = pl.pallas_call(
        functools.partial(_matmul_bn_act_kernel, relu=relu),
        out_shape=jax.ShapeDtypeStruct((Mp, Coutp), out_dtype),
        grid=(Mp // tm,),
        in_specs=[
            pl.BlockSpec((tm, K), lambda i: (i, 0)),
            pl.BlockSpec((K, Coutp), lambda i: (0, 0)),
            pl.BlockSpec((1, Coutp), lambda i: (0, 0)),
            pl.BlockSpec((1, Coutp), lambda i: (0, 0)),
        ],
        out_specs=pl.BlockSpec((tm, Coutp), lambda i: (i, 0)),
        compiler_params=pltpu.CompilerParams(
            dimension_semantics=("parallel",),
            vmem_limit_bytes=_VMEM_LIMIT),
    )(xp, wb, scale, shift)

    if Mp != M or Coutp != Cout:
        out = out[:M, :Cout]
    return out


# --------------- fused (chunked) global-avg-pool + 1x1 conv + BN + ReLU ---------------

def _gap_kernel(x_ref, w_ref, scale_ref, shift_ref, o_ref, acc_ref, *, hw, chunk):
    c = pl.program_id(1)

    @pl.when(c == 0)
    def _():
        acc_ref[...] = jnp.zeros_like(acc_ref)

    base = c * chunk
    rid = jax.lax.broadcasted_iota(jnp.int32, (chunk, 1), 0) + base
    xs = jnp.where(rid < hw, x_ref[0].astype(jnp.float32), 0.0)
    acc_ref[...] += jnp.sum(xs, axis=0, keepdims=True)

    @pl.when(c == pl.num_programs(1) - 1)
    def _():
        pooled = (acc_ref[...] * (1.0 / hw)).astype(jnp.bfloat16)       # (1, C)
        y = jnp.dot(pooled, w_ref[...], preferred_element_type=jnp.float32)
        o_ref[...] = jnp.maximum(y * scale_ref[...] + shift_ref[...], 0.0
                                 ).astype(o_ref.dtype)


def global_pool_conv_bn_relu(x_nhwc, w, scale, shift, out_dtype=jnp.bfloat16):
    N, H, W, C = x_nhwc.shape
    Cout = w.shape[1]
    Coutp = _ceil_to(Cout, 128)

    wb = w.astype(jnp.bfloat16)
    scale = scale.astype(jnp.float32).reshape(1, -1)
    shift = shift.astype(jnp.float32).reshape(1, -1)
    if Coutp != Cout:
        wb = jnp.pad(wb, ((0, 0), (0, Coutp - Cout)))
        scale = jnp.pad(scale, ((0, 0), (0, Coutp - Cout)))
        shift = jnp.pad(shift, ((0, 0), (0, Coutp - Cout)))

    hw = H * W
    chunk = hw if hw <= 2048 else 2048
    n_chunks = pl.cdiv(hw, chunk)
    x3 = x_nhwc.reshape(N, hw, C)

    out = pl.pallas_call(
        functools.partial(_gap_kernel, hw=hw, chunk=chunk),
        out_shape=jax.ShapeDtypeStruct((N, Coutp), out_dtype),
        grid=(N, n_chunks),
        in_specs=[
            pl.BlockSpec((1, chunk, C), lambda n, c: (n, c, 0)),
            pl.BlockSpec((C, Coutp), lambda n, c: (0, 0)),
            pl.BlockSpec((1, Coutp), lambda n, c: (0, 0)),
            pl.BlockSpec((1, Coutp), lambda n, c: (0, 0)),
        ],
        out_specs=pl.BlockSpec((1, Coutp), lambda n, c: (n, 0)),
        scratch_shapes=[pltpu.VMEM((1, C), jnp.float32)],
        compiler_params=pltpu.CompilerParams(
            dimension_semantics=("parallel", "arbitrary"),
            vmem_limit_bytes=_VMEM_LIMIT),
    )(x3, wb, scale, shift)
    return out[:, :Cout] if Coutp != Cout else out


# --------- fused depthwise 3x3 (dilated) + BN + ReLU + pointwise 1x1 + BN + ReLU
# --------- [+ fused classifier 1x1 + bias], row-batched, in-VMEM padding ---------

def _sepconv_kernel(*args, n_in, c_sizes, d, TH, H, W, has_cls):
    x_refs = args[:n_in]
    wdw_ref, dws_ref, dwsh_ref, wpw_ref, pws_ref, pwsh_ref = args[n_in:n_in + 6]
    pos = n_in + 6
    if has_cls:
        wcls_ref, bcls_ref = args[pos:pos + 2]
        pos += 2
    o_ref = args[pos]
    pad_ref = args[pos + 1]

    ht = pl.program_id(1)

    # Assemble the zero-padded (and channel-concatenated) image in VMEM once
    # per image; input blocks are constant along the row-tile axis so HBM is
    # read exactly once.
    @pl.when(ht == 0)
    def _():
        pad_ref[...] = jnp.zeros_like(pad_ref)
        off = 0
        for r, cs in zip(x_refs, c_sizes):
            pad_ref[pl.ds(d, H), pl.ds(d, W), pl.ds(off, cs)] = (
                r[0].astype(pad_ref.dtype))
            off += cs

    h0 = ht * TH
    wdw = wdw_ref[...].astype(jnp.float32)              # (9, 1, C)
    acc = None
    for k in range(9):
        kh, kw = divmod(k, 3)
        slab = pad_ref[pl.ds(h0 + kh * d, TH), pl.ds(kw * d, W), :]   # (TH, W, C)
        t = slab.astype(jnp.float32) * wdw[k]
        acc = t if acc is None else acc + t
    dw = jnp.maximum(acc * dws_ref[...] + dwsh_ref[...], 0.0)         # (TH, W, C)

    y = jnp.dot(dw.reshape(TH * W, -1).astype(jnp.bfloat16), wpw_ref[...],
                preferred_element_type=jnp.float32)                   # (TH*W, Cmid)
    y = jnp.maximum(y * pws_ref[...] + pwsh_ref[...], 0.0)
    if has_cls:
        y = jnp.dot(y.astype(jnp.bfloat16), wcls_ref[...],
                    preferred_element_type=jnp.float32) + bcls_ref[...]
    o_ref[...] = y.reshape(1, TH, W, -1).astype(o_ref.dtype)


def sepconv_bn_relu(xs, c_sizes, w_dw, dw_scale, dw_shift, w_pw, pw_scale, pw_shift,
                    dilation, out_dtype=jnp.bfloat16, w_cls=None, b_cls=None):
    """Fused depthwise 3x3 (dilation=padding) -> BN -> ReLU -> pointwise 1x1 ->
    BN -> ReLU [-> classifier 1x1 + bias].

    `xs` is a list of NHWC tensors whose channels are concatenated inside the
    kernel's VMEM scratch (no HBM concat / pad)."""
    N, H, W, _ = xs[0].shape
    C = sum(c_sizes)
    d = dilation
    Cmid = w_pw.shape[1]
    has_cls = w_cls is not None
    Cout = w_cls.shape[1] if has_cls else Cmid
    Coutp = _ceil_to(Cout, 128) if has_cls else Cout

    TH = _row_tile(H, W)
    n_ht = pl.cdiv(H, TH)

    args = list(xs) + [
        w_dw.reshape(9, 1, C).astype(jnp.float32),
        dw_scale.reshape(1, -1).astype(jnp.float32),
        dw_shift.reshape(1, -1).astype(jnp.float32),
        w_pw.astype(jnp.bfloat16),
        pw_scale.reshape(1, -1).astype(jnp.float32),
        pw_shift.reshape(1, -1).astype(jnp.float32),
    ]
    in_specs = [pl.BlockSpec((1, H, W, cs), lambda n, ht: (n, 0, 0, 0))
                for cs in c_sizes]
    # Constant-index resident params.  TODO(synk): single-buffer on v7x.
    in_specs += [
        pl.BlockSpec((9, 1, C), lambda n, ht: (0, 0, 0)),
        pl.BlockSpec((1, C), lambda n, ht: (0, 0)),
        pl.BlockSpec((1, C), lambda n, ht: (0, 0)),
        pl.BlockSpec((C, Cmid), lambda n, ht: (0, 0)),
        pl.BlockSpec((1, Cmid), lambda n, ht: (0, 0)),
        pl.BlockSpec((1, Cmid), lambda n, ht: (0, 0)),
    ]
    if has_cls:
        wc = w_cls.astype(jnp.bfloat16)
        bc = b_cls.reshape(1, -1).astype(jnp.float32)
        if Coutp != Cout:
            wc = jnp.pad(wc, ((0, 0), (0, Coutp - Cout)))
            bc = jnp.pad(bc, ((0, 0), (0, Coutp - Cout)))
        args += [wc, bc]
        in_specs += [
            pl.BlockSpec((Cmid, Coutp), lambda n, ht: (0, 0)),
            pl.BlockSpec((1, Coutp), lambda n, ht: (0, 0)),
        ]

    out = pl.pallas_call(
        functools.partial(_sepconv_kernel, n_in=len(xs), c_sizes=tuple(c_sizes),
                          d=d, TH=TH, H=H, W=W, has_cls=has_cls),
        out_shape=jax.ShapeDtypeStruct((N, H, W, Coutp), out_dtype),
        grid=(N, n_ht),
        in_specs=in_specs,
        out_specs=pl.BlockSpec((1, TH, W, Coutp), lambda n, ht: (n, ht, 0, 0)),
        scratch_shapes=[pltpu.VMEM((n_ht * TH + 2 * d, W + 2 * d, C),
                                   xs[0].dtype)],
        compiler_params=pltpu.CompilerParams(
            # row-tile axis is sequential (it reuses the per-image scratch).
            dimension_semantics=("parallel", "arbitrary"),
            vmem_limit_bytes=_VMEM_LIMIT),
    )(*args)

    if Coutp != Cout:
        out = out[..., :Cout]
    return out


# ---------- ASPP bottleneck: dense 3x3 conv + BN + ReLU over the (virtual) concat
# ---------- of branch outputs + broadcast global vector, row-batched -------------

def _bottleneck_kernel(*args, n_in, c_sizes, TH, H, W):
    x_refs = args[:n_in]
    g_ref = args[n_in]
    w_ref, scale_ref, shift_ref = args[n_in + 1:n_in + 4]
    o_ref = args[n_in + 4]
    pad_ref = args[n_in + 5]

    ht = pl.program_id(1)

    @pl.when(ht == 0)
    def _():
        pad_ref[...] = jnp.zeros_like(pad_ref)
        off = 0
        for r, cs in zip(x_refs, c_sizes):
            pad_ref[pl.ds(1, H), pl.ds(1, W), pl.ds(off, cs)] = (
                r[0].astype(pad_ref.dtype))
            off += cs
        g = g_ref[...].reshape(1, 1, -1).astype(pad_ref.dtype)
        cg = g.shape[-1]
        pad_ref[pl.ds(1, H), pl.ds(1, W), pl.ds(off, cg)] = jnp.broadcast_to(
            g, (H, W, cg))

    h0 = ht * TH
    acc = None
    for k in range(9):
        kh, kw = divmod(k, 3)
        slab = pad_ref[pl.ds(h0 + kh, TH), pl.ds(kw, W), :]           # (TH, W, Cin)
        t = jnp.dot(slab.reshape(TH * W, -1).astype(jnp.bfloat16), w_ref[k],
                    preferred_element_type=jnp.float32)
        acc = t if acc is None else acc + t
    y = jnp.maximum(acc * scale_ref[...] + shift_ref[...], 0.0)
    o_ref[...] = y.reshape(1, TH, W, -1).astype(o_ref.dtype)


def aspp_bottleneck(branches, g, w, scale, shift, out_dtype=jnp.bfloat16):
    N, H, W, _ = branches[0].shape
    c_sizes = [b.shape[-1] for b in branches]
    Cg = g.shape[-1]
    Cin = sum(c_sizes) + Cg
    Cout = w.shape[-1]

    TH = _row_tile(H, W)
    n_ht = pl.cdiv(H, TH)

    in_specs = [pl.BlockSpec((1, H, W, cs), lambda n, ht: (n, 0, 0, 0))
                for cs in c_sizes]
    in_specs += [
        pl.BlockSpec((1, Cg), lambda n, ht: (n, 0)),
        # TODO(synk): on v7x single-buffer / K-tile this 9xCinxCout weight.
        pl.BlockSpec((9, Cin, Cout), lambda n, ht: (0, 0, 0)),
        pl.BlockSpec((1, Cout), lambda n, ht: (0, 0)),
        pl.BlockSpec((1, Cout), lambda n, ht: (0, 0)),
    ]

    return pl.pallas_call(
        functools.partial(_bottleneck_kernel, n_in=len(branches),
                          c_sizes=tuple(c_sizes), TH=TH, H=H, W=W),
        out_shape=jax.ShapeDtypeStruct((N, H, W, Cout), out_dtype),
        grid=(N, n_ht),
        in_specs=in_specs,
        out_specs=pl.BlockSpec((1, TH, W, Cout), lambda n, ht: (n, ht, 0, 0)),
        scratch_shapes=[pltpu.VMEM((n_ht * TH + 2, W + 2, Cin), jnp.bfloat16)],
        compiler_params=pltpu.CompilerParams(
            dimension_semantics=("parallel", "arbitrary"),
            vmem_limit_bytes=_VMEM_LIMIT),
    )(*branches, g, w.reshape(9, Cin, Cout).astype(jnp.bfloat16),
      scale.reshape(1, -1).astype(jnp.float32),
      shift.reshape(1, -1).astype(jnp.float32))


# ---------------- bilinear resize (align_corners=True), one kernel ----------------

def _interp_indices(out_size, in_size):
    if in_size == 1 or out_size == 1:
        lo = np.zeros((out_size,), np.int32)
        hi = np.zeros((out_size,), np.int32)
        return jnp.asarray(lo), jnp.asarray(hi), 0.0
    ratio = (in_size - 1) / (out_size - 1)
    pos = np.arange(out_size, dtype=np.float64) * ratio
    lo = np.clip(np.floor(pos).astype(np.int32), 0, in_size - 2)
    hi = np.minimum(lo + 1, in_size - 1).astype(np.int32)
    return jnp.asarray(lo), jnp.asarray(hi), float(ratio)


def _interp_matrix(out_size, in_size):
    """Row-stochastic bilinear interpolation matrix, align_corners=True."""
    m = np.zeros((out_size, in_size), np.float32)
    if in_size == 1:
        m[:, 0] = 1.0
        return jnp.asarray(m)
    if out_size == 1:
        m[0, 0] = 1.0
        return jnp.asarray(m)
    pos = np.arange(out_size, dtype=np.float64) * (in_size - 1) / (out_size - 1)
    lo = np.clip(np.floor(pos).astype(np.int64), 0, in_size - 2)
    frac = (pos - lo).astype(np.float32)
    rows = np.arange(out_size)
    m[rows, lo] += 1.0 - frac
    m[rows, lo + 1] += frac
    return jnp.asarray(m)


def _bilinear_row_kernel(lo_ref, hi_ref, xlo_ref, xhi_ref, cm_ref, o_ref, *, ratio):
    ho = pl.program_id(1)
    lo = lo_ref[ho]
    f = ho.astype(jnp.float32) * ratio - lo.astype(jnp.float32)      # H fraction
    row = ((1.0 - f) * xlo_ref[...].astype(jnp.float32)
           + f * xhi_ref[...].astype(jnp.float32))                   # (Win, C)
    out = jnp.dot(cm_ref[...], row.astype(jnp.bfloat16),
                  preferred_element_type=jnp.float32)
    o_ref[...] = out.astype(o_ref.dtype)


def bilinear_resize(x, out_h, out_w):
    """F.interpolate(..., mode='bilinear', align_corners=True) on NHWC."""
    N, Hin, Win, C = x.shape
    if (out_h, out_w) == (Hin, Win):
        return x
    lo, hi, ratio = _interp_indices(out_h, Hin)
    cm = _interp_matrix(out_w, Win).astype(jnp.bfloat16)
    return pl.pallas_call(
        functools.partial(_bilinear_row_kernel, ratio=ratio),
        out_shape=jax.ShapeDtypeStruct((N, out_h, out_w, C), x.dtype),
        grid_spec=pltpu.PrefetchScalarGridSpec(
            num_scalar_prefetch=2,
            grid=(N, out_h),
            in_specs=[
                pl.BlockSpec((None, None, Win, C),
                             lambda n, h, lo, hi: (n, lo[h], 0, 0)),
                pl.BlockSpec((None, None, Win, C),
                             lambda n, h, lo, hi: (n, hi[h], 0, 0)),
                pl.BlockSpec((out_w, Win), lambda n, h, lo, hi: (0, 0)),
            ],
            out_specs=pl.BlockSpec((None, None, out_w, C),
                                   lambda n, h, lo, hi: (n, h, 0, 0)),
        ),
        compiler_params=pltpu.CompilerParams(
            dimension_semantics=("parallel", "parallel"),
            vmem_limit_bytes=_VMEM_LIMIT),
    )(lo, hi, x, x, cm)


# ----------------------------- parameters -----------------------------

def _bn_params(c, eps=1e-5):
    gamma = jnp.ones((c,), jnp.float32)
    beta = jnp.zeros((c,), jnp.float32)
    running_mean = jnp.zeros((c,), jnp.float32)
    running_var = jnp.ones((c,), jnp.float32)
    scale = gamma / jnp.sqrt(running_var + eps)
    shift = beta - running_mean * scale
    return scale, shift


def _kaiming(key, shape, fan_in):
    std = (2.0 / float(fan_in)) ** 0.5
    return jax.random.normal(key, shape, jnp.float32) * std


def init_params(key, inplanes, dilation_series, num_classes):
    OUT = 512
    keys = iter(jax.random.split(key, 64))
    params = {"branches": []}

    for d in dilation_series:
        if d == 1:
            w = _kaiming(next(keys), (inplanes, OUT), fan_in=inplanes)
            s, sh = _bn_params(OUT)
            params["branches"].append({"dilation": 1, "w": w, "scale": s, "shift": sh})
        else:
            w_dw = _kaiming(next(keys), (3, 3, inplanes), fan_in=9)
            dws, dwsh = _bn_params(inplanes)
            w_pw = _kaiming(next(keys), (inplanes, OUT), fan_in=inplanes)
            pws, pwsh = _bn_params(OUT)
            params["branches"].append({"dilation": d,
                                       "w_dw": w_dw, "dw_scale": dws, "dw_shift": dwsh,
                                       "w_pw": w_pw, "pw_scale": pws, "pw_shift": pwsh})

    gw = _kaiming(next(keys), (inplanes, OUT), fan_in=inplanes)
    gs, gsh = _bn_params(OUT)
    params["global"] = {"w": gw, "scale": gs, "shift": gsh}

    cin_b = OUT * (len(dilation_series) + 1)
    bw = _kaiming(next(keys), (3, 3, cin_b, OUT), fan_in=cin_b * 9)
    bs, bsh = _bn_params(OUT)
    params["bottleneck"] = {"w": bw, "scale": bs, "shift": bsh}

    sw = _kaiming(next(keys), (256, 48), fan_in=256)
    ss, ssh = _bn_params(48)
    params["shortcut"] = {"w": sw, "scale": ss, "shift": ssh}

    def ds_params(cin, cout):
        w_dw = _kaiming(next(keys), (3, 3, cin), fan_in=9)
        dws, dwsh = _bn_params(cin)
        w_pw = _kaiming(next(keys), (cin, cout), fan_in=cin)
        pws, pwsh = _bn_params(cout)
        return {"w_dw": w_dw, "dw_scale": dws, "dw_shift": dwsh,
                "w_pw": w_pw, "pw_scale": pws, "pw_shift": pwsh}

    params["dec1"] = ds_params(560, 512)
    params["dec2"] = ds_params(512, 512)

    cw = _kaiming(next(keys), (512, num_classes), fan_in=512)
    bound = 1.0 / (512.0 ** 0.5)
    cb = jax.random.uniform(next(keys), (num_classes,), jnp.float32,
                            minval=-bound, maxval=bound)
    params["classifier"] = {"w": cw, "b": cb}
    return params


# ----------------------------- forward (decode_) -----------------------------

def depthwise_separable_aspp_forward(params, low_level_feat_nchw, x_nchw, size=None):
    low = jnp.transpose(low_level_feat_nchw, (0, 2, 3, 1))   # NHWC
    x = jnp.transpose(x_nchw, (0, 2, 3, 1))                  # NHWC
    N, H, W, Cin = x.shape
    _, Hl, Wl, Cl = low.shape

    # parallel ASPP branches (bf16 outputs: they only feed the bottleneck MXU)
    branch_outs = []
    for bp in params["branches"]:
        if bp["dilation"] == 1:
            y2d = matmul_bn_act(x.reshape(-1, Cin), bp["w"], bp["scale"], bp["shift"],
                                relu=True, out_dtype=jnp.bfloat16)
            branch_outs.append(y2d.reshape(N, H, W, -1))
        else:
            branch_outs.append(
                sepconv_bn_relu([x], [Cin], bp["w_dw"], bp["dw_scale"], bp["dw_shift"],
                                bp["w_pw"], bp["pw_scale"], bp["pw_shift"],
                                dilation=bp["dilation"], out_dtype=jnp.bfloat16))

    # global branch: chunked pool -> 1x1 -> BN -> ReLU; the align_corners upsample
    # of a 1x1 source is an exact broadcast, done inside the bottleneck kernel.
    g = global_pool_conv_bn_relu(x, params["global"]["w"], params["global"]["scale"],
                                 params["global"]["shift"], out_dtype=jnp.bfloat16)

    # bottleneck 3x3 over the virtual concat [branches..., broadcast(g)]
    bott = aspp_bottleneck(branch_outs, g, params["bottleneck"]["w"],
                           params["bottleneck"]["scale"], params["bottleneck"]["shift"],
                           out_dtype=jnp.bfloat16)

    bott_up = bilinear_resize(bott, Hl, Wl)                  # (N,Hl,Wl,512) bf16

    sc = matmul_bn_act(low.reshape(-1, Cl), params["shortcut"]["w"],
                       params["shortcut"]["scale"], params["shortcut"]["shift"],
                       relu=True, out_dtype=jnp.bfloat16)
    sc = sc.reshape(N, Hl, Wl, -1)                           # (N,Hl,Wl,48) bf16

    # decoder: the [bott_up, sc] concat is assembled inside the dec1 kernel;
    # Dropout2d(0.1) is identity in eval; dec2 fuses the final classifier 1x1.
    d1 = params["dec1"]
    feats = sepconv_bn_relu([bott_up, sc], [bott_up.shape[-1], sc.shape[-1]],
                            d1["w_dw"], d1["dw_scale"], d1["dw_shift"],
                            d1["w_pw"], d1["pw_scale"], d1["pw_shift"],
                            dilation=1, out_dtype=jnp.bfloat16)

    d2 = params["dec2"]
    cls = params["classifier"]
    out = sepconv_bn_relu([feats], [feats.shape[-1]],
                          d2["w_dw"], d2["dw_scale"], d2["dw_shift"],
                          d2["w_pw"], d2["pw_scale"], d2["pw_shift"],
                          dilation=1, out_dtype=jnp.float32,
                          w_cls=cls["w"], b_cls=cls["b"])    # (N,Hl,Wl,num_classes)

    if size is not None:
        out = bilinear_resize(out, size[0], size[1])

    return jnp.transpose(out, (0, 3, 1, 2))                  # NCHW


# ----------------------------- main -----------------------------

if __name__ == "__main__":
    key = jax.random.PRNGKey(0)
    k1, k2, k3 = jax.random.split(key, 3)

    inplanes = 64
    num_classes = 8
    dilation_series = [1, 6]     # padding_series follows dilation_series
    N = 1

    # {'out': high-level feature, 'low': low-level feature} in NCHW like PyTorch
    x_out = jax.random.normal(k1, (N, inplanes, 8, 8), jnp.float32)
    x_low = jax.random.normal(k2, (N, 256, 16, 16), jnp.float32)

    params = init_params(k3, inplanes, dilation_series, num_classes)

    out = depthwise_separable_aspp_forward(params, x_low, x_out)
    out = jax.block_until_ready(out)

    assert out.shape == (N, num_classes, 16, 16), out.shape
    assert bool(jnp.all(jnp.isfinite(out)))
    print("KERNEL_OK")
</pallas_src>

<mosaic_0001>
module attributes {stable_mosaic.version = 11 : i64} {
  func.func @_matmul_bn_act_kernel(%arg0: i32, %arg1: memref<64x64xf32, #tpu.memory_space<vmem>>, %arg2: memref<64x512xbf16, #tpu.memory_space<vmem>>, %arg3: memref<1x512xf32, #tpu.memory_space<vmem>>, %arg4: memref<1x512xf32, #tpu.memory_space<vmem>>, %arg5: memref<64x512xbf16, #tpu.memory_space<vmem>>) attributes {dimension_semantics = [#tpu.dimension_semantics<parallel>], iteration_bounds = array<i64: 1>, scalar_prefetch = 0 : i64, scratch_operands = 0 : i64, tpu.core_type = #tpu.core_type<tc>, window_params = [{transform_indices = @transform_0, window_bounds = array<i64: 64, 64>}, {pipeline_mode = #tpu.pipeline_mode<synchronous>, transform_indices = @transform_1, window_bounds = array<i64: 64, 512>}, {pipeline_mode = #tpu.pipeline_mode<synchronous>, transform_indices = @transform_2, window_bounds = array<i64: 1, 512>}, {pipeline_mode = #tpu.pipeline_mode<synchronous>, transform_indices = @transform_3, window_bounds = array<i64: 1, 512>}, {transform_indices = @transform_4, window_bounds = array<i64: 64, 512>}]} {
    %c0 = arith.constant 0 : index
    %c0_0 = arith.constant 0 : index
    %0 = vector.load %arg1[%c0, %c0_0] : memref<64x64xf32, #tpu.memory_space<vmem>>, vector<64x64xf32>
    %1 = arith.truncf %0 : vector<64x64xf32> to vector<64x64xbf16>
    %c0_1 = arith.constant 0 : index
    %c0_2 = arith.constant 0 : index
    %2 = vector.load %arg2[%c0_1, %c0_2] : memref<64x512xbf16, #tpu.memory_space<vmem>>, vector<64x512xbf16>
    %cst = arith.constant dense<0.000000e+00> : vector<64x512xf32>
    %3 = tpu.matmul %1, %2, %cst {dimension_numbers = #tpu.dot_dimension_numbers<[1], [0], [0], [1], [0, 0, 1, 1], [], []>} : vector<64x64xbf16>, vector<64x512xbf16>, vector<64x512xf32> -> vector<64x512xf32>
    %c0_3 = arith.constant 0 : index
    %c0_4 = arith.constant 0 : index
    %4 = vector.load %arg3[%c0_3, %c0_4] : memref<1x512xf32, #tpu.memory_space<vmem>>, vector<1x512xf32>
    %5 = vector.broadcast %4 : vector<1x512xf32> to vector<64x512xf32>
    %6 = arith.mulf %3, %5 : vector<64x512xf32>
    %c0_5 = arith.constant 0 : index
    %c0_6 = arith.constant 0 : index
    %7 = vector.load %arg4[%c0_5, %c0_6] : memref<1x512xf32, #tpu.memory_space<vmem>>, vector<1x512xf32>
    %8 = vector.broadcast %7 : vector<1x512xf32> to vector<64x512xf32>
    %9 = arith.addf %6, %8 : vector<64x512xf32>
    %cst_7 = arith.constant 0.000000e+00 : f32
    %10 = vector.broadcast %cst_7 : f32 to vector<64x512xf32>
    %11 = arith.maximumf %9, %10 : vector<64x512xf32>
    %12 = arith.truncf %11 : vector<64x512xf32> to vector<64x512xbf16>
    %c0_8 = arith.constant 0 : index
    %c0_9 = arith.constant 0 : index
    %13 = vector.load %arg5[%c0_8, %c0_9] : memref<64x512xbf16, #tpu.memory_space<vmem>>, vector<64x512xbf16>
    tpu.vector_store %arg5[%c0_8, %c0_9], %12 {strides = array<i32>} : memref<64x512xbf16, #tpu.memory_space<vmem>>, vector<64x512xbf16>,
    return
  }
  func.func @transform_0(%arg0: i32) -> (i32, i32) {
    %c0_i32 = arith.constant 0 : i32
    %c0_i32_0 = arith.constant 0 : i32
    return %arg0, %c0_i32 : i32, i32
  }
  func.func @transform_1(%arg0: i32) -> (i32, i32) {
    %c0_i32 = arith.constant 0 : i32
    %c0_i32_0 = arith.constant 0 : i32
    %c0_i32_1 = arith.constant 0 : i32
    return %c0_i32, %c0_i32_0 : i32, i32
  }
  func.func @transform_2(%arg0: i32) -> (i32, i32) {
    %c0_i32 = arith.constant 0 : i32
    %c0_i32_0 = arith.constant 0 : i32
    %c0_i32_1 = arith.constant 0 : i32
    return %c0_i32, %c0_i32_0 : i32, i32
  }
  func.func @transform_3(%arg0: i32) -> (i32, i32) {
    %c0_i32 = arith.constant 0 : i32
    %c0_i32_0 = arith.constant 0 : i32
    %c0_i32_1 = arith.constant 0 : i32
    return %c0_i32, %c0_i32_0 : i32, i32
  }
  func.func @transform_4(%arg0: i32) -> (i32, i32) {
    %c0_i32 = arith.constant 0 : i32
    %c0_i32_0 = arith.constant 0 : i32
    return %arg0, %c0_i32 : i32, i32
  }
}

</mosaic_0001>

<llo_original>
// kernel: tpu_custom_call.1
$region0: #{tpu_custom_call.1}
  #allocation0 [shape = 'u32[]', space=smem, size = 0x4, offset = 0x4, fixed_abs, tag = 'smem constant byte address 0x4 - core index']
  #allocation1 [shape = 'u32[144,128]{1,0:T(1,128)}', space=vmem, size = 0x12000, scoped, tag = 'internal scratch']
  %s0 = inlined_call_operand.hbm [shape: f32[64,64], index: 0, kind: input, shape index: {}]
  %s1 = inlined_call_operand.hbm [shape: bf16[64,512], index: 1, kind: input, shape index: {}]
  %s2 = inlined_call_operand.hbm [shape: f32[1,512], index: 2, kind: input, shape index: {}]
  %s3 = inlined_call_operand.vmem [shape: f32[1,512], index: 3, kind: input, shape index: {}]
  %s4 = inlined_call_operand.hbm [shape: bf16[64,512], index: 4, kind: output, shape index: {}]
  %s5 = sld [smem:[#allocation0]]
  $region38: #{tpu_custom_call.1} parent=0
    _
  %s7 = ssub.s32 1, %s5
  %s8 = scalar_select 0, %s7, %s5
  $region1: #{tpu_custom_call.1} parent=0
    #allocation2 [shape = 'u8[32768]{0}', space=vmem, size = 0x8000, scoped, tag = 'input window, operand 0, single buffered']
    #allocation3 [shape = 's32[1]{0}', space=sflag, size = 0x4, scoped, tag = 'scoped memory for tpu_custom_call.1']
    #allocation4 [shape = 's32[1]{0}', space=sflag, size = 0x4, scoped, tag = 'scoped memory for tpu_custom_call.1']
    #allocation5 [shape = 'u8[65536]{0}', space=vmem, size = 0x10000, scoped, tag = 'input window, operand 1, single buffered']
    #allocation6 [shape = 's32[1]{0}', space=sflag, size = 0x4, scoped, tag = 'scoped memory for tpu_custom_call.1']
    #allocation7 [shape = 'u8[2048]{0}', space=vmem, size = 0x800, scoped, tag = 'input window, operand 2, single buffered']
    #allocation8 [shape = 'u8[65536]{0}', space=vmem, size = 0x10000, scoped, tag = 'output window, operand 0, single buffered']
    %9 = vsyncpa [#allocation3], 0
    %10 = vsyncpa [#allocation6], 0
    %11 = vsyncpa [#allocation4], 0
    // Predicated region
    $region2: #{tpu_custom_call.1} parent=1 // pred_check
      _
    $region3: #{tpu_custom_call.1} parent=1 // pred_check_branch
      %13 = sbr.rel (0) target = $region5
    $region4: #{tpu_custom_call.1} parent=1 // pred_region
      %s15 = ssub.s32 1024, 1024
      %16 = vsyncadd [#allocation3], %s15
      %s17 = sshll.u32 [#allocation2], 4
      %s18 = int_to_ptr.vmem [resolvable:$true] %s17
      %23 = dma.hbm_to_vmem [thread:$0]  %s0, 1024, %s18, [#allocation3], 128, 128, 8
    $region5: #{tpu_custom_call.1} parent=1 // pred_fallthru
      _
    // Predicated region
    $region6: #{tpu_custom_call.1} parent=1 // pred_check
      _
    $region7: #{tpu_custom_call.1} parent=1 // pred_check_branch
      %25 = sbr.rel (0) target = $region9
    $region8: #{tpu_custom_call.1} parent=1 // pred_region
      %s27 = ssub.s32 2048, 2048
      %28 = vsyncadd [#allocation6], %s27
      %s29 = sshll.u32 [#allocation5], 4
      %s30 = int_to_ptr.vmem [resolvable:$true] %s29
      %35 = dma.hbm_to_vmem [thread:$0]  %s1, 2048, %s30, [#allocation6], 256, 256, 16
    $region9: #{tpu_custom_call.1} parent=1 // pred_fallthru
      _
    // Predicated region
    $region10: #{tpu_custom_call.1} parent=1 // pred_check
      _
    $region11: #{tpu_custom_call.1} parent=1 // pred_check_branch
      %37 = sbr.rel (0) target = $region13
    $region12: #{tpu_custom_call.1} parent=1 // pred_region
      %s39 = ssub.s32 64, 64
      %40 = vsyncadd [#allocation6], %s39
      %s42 = sshll.u32 [#allocation7], 4
      %s43 = int_to_ptr.vmem [resolvable:$true] %s42
      %45 = dma.hbm_to_vmem [thread:$0]  %s2, 64, %s43, [#allocation6]
    $region13: #{tpu_custom_call.1} parent=1 // pred_fallthru
      _
    // Predicated region
    $region14: #{tpu_custom_call.1} parent=1 // pred_check
      _
    $region15: #{tpu_custom_call.1} parent=1 // pred_check_branch
      %47 = sbr.rel (0) target = $region17
    $region16: #{tpu_custom_call.1} parent=1 // pred_region
      _
    $region17: #{tpu_custom_call.1} parent=1 // pred_fallthru
      _
    // Predicated region
    $region18: #{tpu_custom_call.1} parent=1 // pred_check
      _
    $region19: #{tpu_custom_call.1} parent=1 // pred_check_branch
      %49 = sbr.rel (0) target = $region21
    $region20: #{tpu_custom_call.1} parent=1 // pred_region
      %50 = dma.done [#allocation3], 1024
    $region21: #{tpu_custom_call.1} parent=1 // pred_fallthru
      _
    // Predicated region
    $region22: #{tpu_custom_call.1} parent=1 // pred_check
      _
    $region23: #{tpu_custom_call.1} parent=1 // pred_check_branch
      %52 = sbr.rel (0) target = $region25
    $region24: #{tpu_custom_call.1} parent=1 // pred_region
      %53 = dma.done [#allocation6], 2048
    $region25: #{tpu_custom_call.1} parent=1 // pred_fallthru
      _
    // Predicated region
    $region26: #{tpu_custom_call.1} parent=1 // pred_check
      _
    $region27: #{tpu_custom_call.1} parent=1 // pred_check_branch
      %55 = sbr.rel (0) target = $region29
    $region28: #{tpu_custom_call.1} parent=1 // pred_region
      %56 = dma.done [#allocation6], 64
    $region29: #{tpu_custom_call.1} parent=1 // pred_fallthru
      _
    %v58 = vld [vmem:[#allocation2] sm:$0xff]
    %v59 = vld [vmem:[#allocation2 + $0x8] sm:$0xff]
    %v60 = vld [vmem:[#allocation2 + $0x10] sm:$0xff]
    %v61 = vld [vmem:[#allocation2 + $0x18] sm:$0xff]
    %v62 = vld [vmem:[#allocation2 + $0x20] sm:$0xff]
    %v63 = vld [vmem:[#allocation2 + $0x28] sm:$0xff]
    %v64 = vld [vmem:[#allocation2 + $0x30] sm:$0xff]
    %v65 = vld [vmem:[#allocation2 + $0x38] sm:$0xff]
    %v66 = vpack.c.bf16 %v59, %v58
    %v67 = vpack.c.bf16 %v61, %v60
    %v68 = vpack.c.bf16 %v63, %v62
    %v69 = vpack.c.bf16 %v65, %v64
    %v70 = vld [vmem:[#allocation5] sm:$0xff]
    %v71 = vld [vmem:[#allocation5 + $0x8] sm:$0xff]
    %v72 = vld [vmem:[#allocation5 + $0x10] sm:$0xff]
    %v73 = vld [vmem:[#allocation5 + $0x18] sm:$0xff]
    %v74 = vld [vmem:[#allocation5 + $0x20] sm:$0xff]
    %v75 = vld [vmem:[#allocation5 + $0x28] sm:$0xff]
    %v76 = vld [vmem:[#allocation5 + $0x30] sm:$0xff]
    %v77 = vld [vmem:[#allocation5 + $0x38] sm:$0xff]
    %v78 = vld [vmem:[#allocation5 + $0x40] sm:$0xff]
    %v79 = vld [vmem:[#allocation5 + $0x48] sm:$0xff]
    %v80 = vld [vmem:[#allocation5 + $0x50] sm:$0xff]
    %v81 = vld [vmem:[#allocation5 + $0x58] sm:$0xff]
    %v82 = vld [vmem:[#allocation5 + $0x60] sm:$0xff]
    %v83 = vld [vmem:[#allocation5 + $0x68] sm:$0xff]
    %v84 = vld [vmem:[#allocation5 + $0x70] sm:$0xff]
    %v85 = vld [vmem:[#allocation5 + $0x78] sm:$0xff]
    %v102 = vunpack.c.l.b16 %v70
    %v103 = vunpack.c.h.b16 %v70
    %v104 = vunpack.c.l.b16 %v71
    %v105 = vunpack.c.h.b16 %v71
    %v106 = vunpack.c.l.b16 %v72
    %v107 = vunpack.c.h.b16 %v72
    %v108 = vunpack.c.l.b16 %v73
    %v109 = vunpack.c.h.b16 %v73
    %v110 = vunpack.c.l.b16 %v74
    %v111 = vunpack.c.h.b16 %v74
    %v112 = vunpack.c.l.b16 %v75
    %v113 = vunpack.c.h.b16 %v75
    %v114 = vunpack.c.l.b16 %v76
    %v115 = vunpack.c.h.b16 %v76
    %v116 = vunpack.c.l.b16 %v77
    %v117 = vunpack.c.h.b16 %v77
    %v118 = vunpack.c.l.b16 %v78
    %v119 = vunpack.c.h.b16 %v78
    %v120 = vunpack.c.l.b16 %v79
    %v121 = vunpack.c.h.b16 %v79
    %v122 = vunpack.c.l.b16 %v80
    %v123 = vunpack.c.h.b16 %v80
    %v124 = vunpack.c.l.b16 %v81
    %v125 = vunpack.c.h.b16 %v81
    %v126 = vunpack.c.l.b16 %v82
    %v127 = vunpack.c.h.b16 %v82
    %v128 = vunpack.c.l.b16 %v83
    %v129 = vunpack.c.h.b16 %v83
    %v130 = vunpack.c.l.b16 %v84
    %v131 = vunpack.c.h.b16 %v84
    %v132 = vunpack.c.l.b16 %v85
    %v133 = vunpack.c.h.b16 %v85
    %v134 = vpack.c.b16 %v106, %v102
    %v135 = vpack.c.b16 %v107, %v103
    %v136 = vpack.c.b16 %v108, %v104
    %v137 = vpack.c.b16 %v109, %v105
    %v138 = vpack.c.b16 %v114, %v110
    %v139 = vpack.c.b16 %v115, %v111
    %v140 = vpack.c.b16 %v116, %v112
    %v141 = vpack.c.b16 %v117, %v113
    %v142 = vpack.c.b16 %v122, %v118
    %v143 = vpack.c.b16 %v123, %v119
    %v144 = vpack.c.b16 %v124, %v120
    %v145 = vpack.c.b16 %v125, %v121
    %v146 = vpack.c.b16 %v130, %v126
    %v147 = vpack.c.b16 %v131, %v127
    %v148 = vpack.c.b16 %v132, %v128
    %v149 = vpack.c.b16 %v133, %v129
    %vm166 = vcmask 523264
    %v168 = vsel %vm166, %v66, 0
    %v171 = vsel %vm166, %v67, 0
    %v174 = vsel %vm166, %v68, 0
    %v177 = vsel %vm166, %v69, 0
    %179 = vmatprep.subr.bf16.mxu0 0
    %180 = vmatpush1.bf16.msra.mxu0 0
    %181 = vmatprep.subr.bf16.mxu0 0
    %182 = vmatpush1.bf16.msra.mxu0 0
    %183 = vmatprep.subr.bf16.mxu0 0
    %184 = vmatpush1.bf16.msra.mxu0 0
    %185 = vmatprep.subr.bf16.mxu0 0
    %186 = vmatpush1.bf16.msra.mxu0 0
    %187 = vmatprep.subr.bf16.mxu0 %v147
    %188 = vmatpush1.bf16.msra.mxu0 %v146
    %189 = vmatprep.subr.bf16.mxu0 %v143
    %190 = vmatpush1.bf16.msra.mxu0 %v142
    %191 = vmatprep.subr.bf16.mxu0 %v139
    %192 = vmatpush1.bf16.msra.mxu0 %v138
    %193 = vmatprep.subr.bf16.mxu0 %v135
    %194 = vmatpush1.bf16.msra.mxu0 %v134
    %195 = vmatprep.subr.bf16.mxu0 0
    %196 = vmatpush2.bf16.msra.mxu0 0
    %197 = vmatprep.subr.bf16.mxu0 0
    %198 = vmatpush2.bf16.msra.mxu0 0
    %199 = vmatprep.subr.bf16.mxu0 0
    %200 = vmatpush2.bf16.msra.mxu0 0
    %201 = vmatprep.subr.bf16.mxu0 0
    %202 = vmatpush2.bf16.msra.mxu0 0
    %203 = vmatprep.subr.bf16.mxu0 0
    %204 = vmatpush2.bf16.msra.mxu0 0
    %205 = vmatprep.subr.bf16.mxu0 0
    %206 = vmatpush2.bf16.msra.mxu0 0
    %207 = vmatprep.subr.bf16.mxu0 0
    %208 = vmatpush2.bf16.msra.mxu0 0
    %209 = vmatprep.subr.bf16.mxu0 0
    %210 = vmatpush2.bf16.msra.mxu0 0
    %211 = vmatprep.mubr.bf16.mxu0 0
    %212 = vmatmul.mubr.bf16.gmra.mxu0 %v168
    %v213 = vpop.f32.mrf.mxu0
    %v214 = vadd.f32 0.0, %v213
    %v215 = vpop.f32.mrf.mxu0
    %v216 = vadd.f32 0.0, %v215
    %v217 = vpop.f32.mrf.mxu0
    %v218 = vadd.f32 0.0, %v217
    %v219 = vpop.f32.mrf.mxu0
    %v220 = vadd.f32 0.0, %v219
    %221 = vmatprep.mubr.bf16.mxu0 0
    %222 = vmatmul.mubr.bf16.gmra.mxu0 %v171
    %v223 = vpop.f32.mrf.mxu0
    %v224 = vadd.f32 0.0, %v223
    %v225 = vpop.f32.mrf.mxu0
    %v226 = vadd.f32 0.0, %v225
    %v227 = vpop.f32.mrf.mxu0
    %v228 = vadd.f32 0.0, %v227
    %v229 = vpop.f32.mrf.mxu0
    %v230 = vadd.f32 0.0, %v229
    %231 = vmatprep.mubr.bf16.mxu0 0
    %232 = vmatmul.mubr.bf16.gmra.mxu0 %v174
    %v233 = vpop.f32.mrf.mxu0
    %v234 = vadd.f32 0.0, %v233
    %v235 = vpop.f32.mrf.mxu0
    %v236 = vadd.f32 0.0, %v235
    %v237 = vpop.f32.mrf.mxu0
    %v238 = vadd.f32 0.0, %v237
    %v239 = vpop.f32.mrf.mxu0
    %v240 = vadd.f32 0.0, %v239
    %241 = vmatprep.mubr.bf16.mxu0 0
    %242 = vmatmul.mubr.bf16.gmra.mxu0 %v177
    %v243 = vpop.f32.mrf.mxu0
    %v244 = vadd.f32 0.0, %v243
    %v245 = vpop.f32.mrf.mxu0
    %v246 = vadd.f32 0.0, %v245
    %v247 = vpop.f32.mrf.mxu0
    %v248 = vadd.f32 0.0, %v247
    %v249 = vpop.f32.mrf.mxu0
    %v250 = vadd.f32 0.0, %v249
    %251 = vdwg.mxu0
    %252 = vmatprep.subr.bf16.mxu0 0
    %253 = vmatpush1.bf16.msra.mxu0 0
    %254 = vmatprep.subr.bf16.mxu0 0
    %255 = vmatpush1.bf16.msra.mxu0 0
    %256 = vmatprep.subr.bf16.mxu0 0
    %257 = vmatpush1.bf16.msra.mxu0 0
    %258 = vmatprep.subr.bf16.mxu0 0
    %259 = vmatpush1.bf16.msra.mxu0 0
    %260 = vmatprep.subr.bf16.mxu0 %v149
    %261 = vmatpush1.bf16.msra.mxu0 %v148
    %262 = vmatprep.subr.bf16.mxu0 %v145
    %263 = vmatpush1.bf16.msra.mxu0 %v144
    %264 = vmatprep.subr.bf16.mxu0 %v141
    %265 = vmatpush1.bf16.msra.mxu0 %v140
    %266 = vmatprep.subr.bf16.mxu0 %v137
    %267 = vmatpush1.bf16.msra.mxu0 %v136
    %268 = vmatprep.subr.bf16.mxu0 0
    %269 = vmatpush2.bf16.msra.mxu0 0
    %270 = vmatprep.subr.bf16.mxu0 0
    %271 = vmatpush2.bf16.msra.mxu0 0
    %272 = vmatprep.subr.bf16.mxu0 0
    %273 = vmatpush2.bf16.msra.mxu0 0
    %274 = vmatprep.subr.bf16.mxu0 0
    %275 = vmatpush2.bf16.msra.mxu0 0
    %276 = vmatprep.subr.bf16.mxu0 0
    %277 = vmatpush2.bf16.msra.mxu0 0
    %278 = vmatprep.subr.bf16.mxu0 0
    %279 = vmatpush2.bf16.msra.mxu0 0
    %280 = vmatprep.subr.bf16.mxu0 0
    %281 = vmatpush2.bf16.msra.mxu0 0
    %282 = vmatprep.subr.bf16.mxu0 0
    %283 = vmatpush2.bf16.msra.mxu0 0
    %284 = vmatprep.mubr.bf16.mxu0 0
    %285 = vmatmul.mubr.bf16.gmra.mxu0 %v168
    %v286 = vpop.f32.mrf.mxu0
    %v287 = vadd.f32 0.0, %v286
    %v288 = vpop.f32.mrf.mxu0
    %v289 = vadd.f32 0.0, %v288
    %v290 = vpop.f32.mrf.mxu0
    %v291 = vadd.f32 0.0, %v290
    %v292 = vpop.f32.mrf.mxu0
    %v293 = vadd.f32 0.0, %v292
    %294 = vmatprep.mubr.bf16.mxu0 0
    %295 = vmatmul.mubr.bf16.gmra.mxu0 %v171
    %v296 = vpop.f32.mrf.mxu0
    %v297 = vadd.f32 0.0, %v296
    %v298 = vpop.f32.mrf.mxu0
    %v299 = vadd.f32 0.0, %v298
    %v300 = vpop.f32.mrf.mxu0
    %v301 = vadd.f32 0.0, %v300
    %v302 = vpop.f32.mrf.mxu0
    %v303 = vadd.f32 0.0, %v302
    %304 = vmatprep.mubr.bf16.mxu0 0
    %305 = vmatmul.mubr.bf16.gmra.mxu0 %v174
    %v306 = vpop.f32.mrf.mxu0
    %v307 = vadd.f32 0.0, %v306
    %v308 = vpop.f32.mrf.mxu0
    %v309 = vadd.f32 0.0, %v308
    %v310 = vpop.f32.mrf.mxu0
    %v311 = vadd.f32 0.0, %v310
    %v312 = vpop.f32.mrf.mxu0
    %v313 = vadd.f32 0.0, %v312
    %314 = vmatprep.mubr.bf16.mxu0 0
    %315 = vmatmul.mubr.bf16.gmra.mxu0 %v177
    %v316 = vpop.f32.mrf.mxu0
    %v317 = vadd.f32 0.0, %v316
    %v318 = vpop.f32.mrf.mxu0
    %v319 = vadd.f32 0.0, %v318
    %v320 = vpop.f32.mrf.mxu0
    %v321 = vadd.f32 0.0, %v320
    %v322 = vpop.f32.mrf.mxu0
    %v323 = vadd.f32 0.0, %v322
    %324 = vdwg.mxu0
    %v325 = vld [vmem:[#allocation7] sm:$0xf]
    %v327 = vlaneseq
    %v328 = vshrl.u32 %v327, 7
    %v329 = vsub.s32 0, %v328
    %v330 = vrot.slane %v325, %v329
    %v331 = vlaneseq
    %v332 = vshrl.u32 %v331, 7
    %v333 = vsub.s32 1, %v332
    %v334 = vrot.slane %v325, %v333
    %v335 = vlaneseq
    %v336 = vshrl.u32 %v335, 7
    %v337 = vsub.s32 2, %v336
    %v338 = vrot.slane %v325, %v337
    %v339 = vlaneseq
    %v340 = vshrl.u32 %v339, 7
    %v341 = vsub.s32 3, %v340
    %v342 = vrot.slane %v325, %v341
    %v347 = vmul.f32 %v214, %v330
    %v348 = vmul.f32 %v216, %v334
    %v349 = vmul.f32 %v287, %v338
    %v350 = vmul.f32 %v289, %v342
    %v351 = vmul.f32 %v218, %v330
    %v352 = vmul.f32 %v220, %v334
    %v353 = vmul.f32 %v291, %v338
    %v354 = vmul.f32 %v293, %v342
    %v355 = vmul.f32 %v224, %v330
    %v356 = vmul.f32 %v226, %v334
    %v357 = vmul.f32 %v297, %v338
    %v358 = vmul.f32 %v299, %v342
    %v359 = vmul.f32 %v228, %v330
    %v360 = vmul.f32 %v230, %v334
    %v361 = vmul.f32 %v301, %v338
    %v362 = vmul.f32 %v303, %v342
    %v363 = vmul.f32 %v234, %v330
    %v364 = vmul.f32 %v236, %v334
    %v365 = vmul.f32 %v307, %v338
    %v366 = vmul.f32 %v309, %v342
    %v367 = vmul.f32 %v238, %v330
    %v368 = vmul.f32 %v240, %v334
    %v369 = vmul.f32 %v311, %v338
    %v370 = vmul.f32 %v313, %v342
    %v371 = vmul.f32 %v244, %v330
    %v372 = vmul.f32 %v246, %v334
    %v373 = vmul.f32 %v317, %v338
    %v374 = vmul.f32 %v319, %v342
    %v375 = vmul.f32 %v248, %v330
    %v376 = vmul.f32 %v250, %v334
    %v377 = vmul.f32 %v321, %v338
    %v378 = vmul.f32 %v323, %v342
    %v379 = vld [vmem:[%s3] sm:$0xf]
    %v381 = vlaneseq
    %v382 = vshrl.u32 %v381, 7
    %v383 = vsub.s32 0, %v382
    %v384 = vrot.slane %v379, %v383
    %v385 = vlaneseq
    %v386 = vshrl.u32 %v385, 7
    %v387 = vsub.s32 1, %v386
    %v388 = vrot.slane %v379, %v387
    %v389 = vlaneseq
    %v390 = vshrl.u32 %v389, 7
    %v391 = vsub.s32 2, %v390
    %v392 = vrot.slane %v379, %v391
    %v393 = vlaneseq
    %v394 = vshrl.u32 %v393, 7
    %v395 = vsub.s32 3, %v394
    %v396 = vrot.slane %v379, %v395
    %v401 = vadd.f32 %v347, %v384
    %v402 = vadd.f32 %v348, %v388
    %v403 = vadd.f32 %v349, %v392
    %v404 = vadd.f32 %v350, %v396
    %v405 = vadd.f32 %v351, %v384
    %v406 = vadd.f32 %v352, %v388
    %v407 = vadd.f32 %v353, %v392
    %v408 = vadd.f32 %v354, %v396
    %v409 = vadd.f32 %v355, %v384
    %v410 = vadd.f32 %v356, %v388
    %v411 = vadd.f32 %v357, %v392
    %v412 = vadd.f32 %v358, %v396
    %v413 = vadd.f32 %v359, %v384
    %v414 = vadd.f32 %v360, %v388
    %v415 = vadd.f32 %v361, %v392
    %v416 = vadd.f32 %v362, %v396
    %v417 = vadd.f32 %v363, %v384
    %v418 = vadd.f32 %v364, %v388
    %v419 = vadd.f32 %v365, %v392
    %v420 = vadd.f32 %v366, %v396
    %v421 = vadd.f32 %v367, %v384
    %v422 = vadd.f32 %v368, %v388
    %v423 = vadd.f32 %v369, %v392
    %v424 = vadd.f32 %v370, %v396
    %v425 = vadd.f32 %v371, %v384
    %v426 = vadd.f32 %v372, %v388
    %v427 = vadd.f32 %v373, %v392
    %v428 = vadd.f32 %v374, %v396
    %v429 = vadd.f32 %v375, %v384
    %v430 = vadd.f32 %v376, %v388
    %v431 = vadd.f32 %v377, %v392
    %v432 = vadd.f32 %v378, %v396
    %v433 = vmax.f32 %v401, 0.0
    %v434 = vmax.f32 %v402, 0.0
    %v435 = vmax.f32 %v403, 0.0
    %v436 = vmax.f32 %v404, 0.0
    %v437 = vmax.f32 %v405, 0.0
    %v438 = vmax.f32 %v406, 0.0
    %v439 = vmax.f32 %v407, 0.0
    %v440 = vmax.f32 %v408, 0.0
    %v441 = vmax.f32 %v409, 0.0
    %v442 = vmax.f32 %v410, 0.0
    %v443 = vmax.f32 %v411, 0.0
    %v444 = vmax.f32 %v412, 0.0
    %v445 = vmax.f32 %v413, 0.0
    %v446 = vmax.f32 %v414, 0.0
    %v447 = vmax.f32 %v415, 0.0
    %v448 = vmax.f32 %v416, 0.0
    %v449 = vmax.f32 %v417, 0.0
    %v450 = vmax.f32 %v418, 0.0
    %v451 = vmax.f32 %v419, 0.0
    %v452 = vmax.f32 %v420, 0.0
    %v453 = vmax.f32 %v421, 0.0
    %v454 = vmax.f32 %v422, 0.0
    %v455 = vmax.f32 %v423, 0.0
    %v456 = vmax.f32 %v424, 0.0
    %v457 = vmax.f32 %v425, 0.0
    %v458 = vmax.f32 %v426, 0.0
    %v459 = vmax.f32 %v427, 0.0
    %v460 = vmax.f32 %v428, 0.0
    %v461 = vmax.f32 %v429, 0.0
    %v462 = vmax.f32 %v430, 0.0
    %v463 = vmax.f32 %v431, 0.0
    %v464 = vmax.f32 %v432, 0.0
    %v465 = vpack.c.bf16 %v437, %v433
    %v466 = vpack.c.bf16 %v438, %v434
    %v467 = vpack.c.bf16 %v439, %v435
    %v468 = vpack.c.bf16 %v440, %v436
    %v469 = vpack.c.bf16 %v445, %v441
    %v470 = vpack.c.bf16 %v446, %v442
    %v471 = vpack.c.bf16 %v447, %v443
    %v472 = vpack.c.bf16 %v448, %v444
    %v473 = vpack.c.bf16 %v453, %v449
    %v474 = vpack.c.bf16 %v454, %v450
    %v475 = vpack.c.bf16 %v455, %v451
    %v476 = vpack.c.bf16 %v456, %v452
    %v477 = vpack.c.bf16 %v461, %v457
    %v478 = vpack.c.bf16 %v462, %v458
    %v479 = vpack.c.bf16 %v463, %v459
    %v480 = vpack.c.bf16 %v464, %v460
    %v497 = vunpack.c.l.b16 %v465
    %v498 = vunpack.c.l.b16 %v466
    %v499 = vunpack.c.l.b16 %v467
    %v500 = vunpack.c.l.b16 %v468
    %v501 = vunpack.c.h.b16 %v465
    %v502 = vunpack.c.h.b16 %v466
    %v503 = vunpack.c.h.b16 %v467
    %v504 = vunpack.c.h.b16 %v468
    %v505 = vunpack.c.l.b16 %v469
    %v506 = vunpack.c.l.b16 %v470
    %v507 = vunpack.c.l.b16 %v471
    %v508 = vunpack.c.l.b16 %v472
    %v509 = vunpack.c.h.b16 %v469
    %v510 = vunpack.c.h.b16 %v470
    %v511 = vunpack.c.h.b16 %v471
    %v512 = vunpack.c.h.b16 %v472
    %v513 = vunpack.c.l.b16 %v473
    %v514 = vunpack.c.l.b16 %v474
    %v515 = vunpack.c.l.b16 %v475
    %v516 = vunpack.c.l.b16 %v476
    %v517 = vunpack.c.h.b16 %v473
    %v518 = vunpack.c.h.b16 %v474
    %v519 = vunpack.c.h.b16 %v475
    %v520 = vunpack.c.h.b16 %v476
    %v521 = vunpack.c.l.b16 %v477
    %v522 = vunpack.c.l.b16 %v478
    %v523 = vunpack.c.l.b16 %v479
    %v524 = vunpack.c.l.b16 %v480
    %v525 = vunpack.c.h.b16 %v477
    %v526 = vunpack.c.h.b16 %v478
    %v527 = vunpack.c.h.b16 %v479
    %v528 = vunpack.c.h.b16 %v480
    %v529 = vpack.c.b16 %v498, %v497
    %v530 = vpack.c.b16 %v500, %v499
    %v531 = vpack.c.b16 %v502, %v501
    %v532 = vpack.c.b16 %v504, %v503
    %v533 = vpack.c.b16 %v506, %v505
    %v534 = vpack.c.b16 %v508, %v507
    %v535 = vpack.c.b16 %v510, %v509
    %v536 = vpack.c.b16 %v512, %v511
    %v537 = vpack.c.b16 %v514, %v513
    %v538 = vpack.c.b16 %v516, %v515
    %v539 = vpack.c.b16 %v518, %v517
    %v540 = vpack.c.b16 %v520, %v519
    %v541 = vpack.c.b16 %v522, %v521
    %v542 = vpack.c.b16 %v524, %v523
    %v543 = vpack.c.b16 %v526, %v525
    %v544 = vpack.c.b16 %v528, %v527
    %561 = vst [vmem:[#allocation8] sm:$0xff] %v529
    %562 = vst [vmem:[#allocation8 + $0x8] sm:$0xff] %v530
    %563 = vst [vmem:[#allocation8 + $0x10] sm:$0xff] %v531
    %564 = vst [vmem:[#allocation8 + $0x18] sm:$0xff] %v532
    %565 = vst [vmem:[#allocation8 + $0x20] sm:$0xff] %v533
    %566 = vst [vmem:[#allocation8 + $0x28] sm:$0xff] %v534
    %567 = vst [vmem:[#allocation8 + $0x30] sm:$0xff] %v535
    %568 = vst [vmem:[#allocation8 + $0x38] sm:$0xff] %v536
    %569 = vst [vmem:[#allocation8 + $0x40] sm:$0xff] %v537
    %570 = vst [vmem:[#allocation8 + $0x48] sm:$0xff] %v538
    %571 = vst [vmem:[#allocation8 + $0x50] sm:$0xff] %v539
    %572 = vst [vmem:[#allocation8 + $0x58] sm:$0xff] %v540
    %573 = vst [vmem:[#allocation8 + $0x60] sm:$0xff] %v541
    %574 = vst [vmem:[#allocation8 + $0x68] sm:$0xff] %v542
    %575 = vst [vmem:[#allocation8 + $0x70] sm:$0xff] %v543
    %576 = vst [vmem:[#allocation8 + $0x78] sm:$0xff] %v544
    // Predicated region
    $region30: #{tpu_custom_call.1} parent=1 // pred_check
      _
    $region31: #{tpu_custom_call.1} parent=1 // pred_check_branch
      %578 = sbr.rel (0) target = $region33
    $region32: #{tpu_custom_call.1} parent=1 // pred_region
      %s580 = ssub.s32 2048, 2048
      %581 = vsyncadd [#allocation4], %s580
      %s582 = sshll.u32 [#allocation8], 4
      %s583 = int_to_ptr.vmem [resolvable:$true] %s582
      %588 = dma.vmem_to_hbm [thread:$0]  %s583, 2048, %s4, [#allocation4], 256, 256, 16
    $region33: #{tpu_custom_call.1} parent=1 // pred_fallthru
      _
    // Predicated region
    $region34: #{tpu_custom_call.1} parent=1 // pred_check
      _
    $region35: #{tpu_custom_call.1} parent=1 // pred_check_branch
      %590 = sbr.rel (0) target = $region37
    $region36: #{tpu_custom_call.1} parent=1 // pred_region
      %591 = dma.done [#allocation4], 2048
    $region37: #{tpu_custom_call.1} parent=1 // pred_fallthru
      _
    %592 = vsyncpa [#allocation3], 1
    %593 = vsyncpa [#allocation6], 1
    %594 = vsyncpa [#allocation4], 1

</llo_original>
